<compile_context>
chip_gen: v5e
topology: v5e:2x2
jax: 0.10.0
libtpu: 0.0.40
codegen_flags: <defaults>
</compile_context>

<pallas_src>
import functools

import jax
import jax.numpy as jnp
from jax.experimental import pallas as pl
from jax.experimental.pallas import tpu as pltpu

NEG_SLOPE = 0.01  # nn.LeakyReLU() default negative_slope


def gat_kernel(att_ref, ce_ref, c_ref, a_ref, p_ref, v_ref, out_ref, *,
               embed_d, g_pack):
    """One grid step over tbg group-rows (each group-row = g_pack batch rows)."""
    E = embed_d
    two_e = 2 * E
    att = att_ref[...]                       # [1, 2E], f32 (scores accumulate in f32)
    aggs = (c_ref, a_ref, p_ref, v_ref)

    for k in range(g_pack):                  # static unroll over packed batch rows
        base = 4 * k * two_e

        # ---- scores: 4 segment reductions, only one (tbg, 2E) temp alive ----
        s = []
        for t in range(4):
            seg = ce_ref[:, base + t * two_e: base + (t + 1) * two_e]
            prod = seg.astype(jnp.float32) * att             # [tbg, 2E]
            raw = jnp.sum(prod, axis=-1, keepdims=True)      # [tbg, 1]
            s.append(jnp.where(raw > 0, raw, NEG_SLOPE * raw))  # LeakyReLU

        # ---- softmax over the 4 neighbour types (exact, max-subtracted) ----
        m = jnp.maximum(jnp.maximum(s[0], s[1]), jnp.maximum(s[2], s[3]))
        e = [jnp.exp(si - m) for si in s]
        inv = 1.0 / (e[0] + e[1] + e[2] + e[3])  # exact divide; kernel is DMA-bound

        # ---- weighted aggregation over the 4 neighbour types (f32 acc) ----
        lo, hi = k * E, (k + 1) * E
        acc = (e[0] * inv) * aggs[0][:, lo:hi].astype(jnp.float32)
        for t in range(1, 4):
            acc = acc + (e[t] * inv) * aggs[t][:, lo:hi].astype(jnp.float32)
        out_ref[:, lo:hi] = acc.astype(out_ref.dtype)


def _round_up(x, m):
    return ((x + m - 1) // m) * m


def _plan_tiles(B, E, itemsize):
    """Choose packing factor g, batch tile tbg (group-rows), grid, VMEM limit."""
    # Pack g batch rows per lane-row so every HBM block is >= 128 lanes wide.
    # Cap at 8 so any padding stays at "multiple of <= 8 rows".
    g = 1 if E >= 128 else min(8, pl.cdiv(128, E))
    B_pad = _round_up(B, g)                  # tiny pad only; never to tile size
    G = B_pad // g

    lane = 128
    # Double-buffered HBM<->VMEM blocks per group-row: ce (8Eg) + 4 aggs + out.
    io_row = itemsize * (_round_up(8 * E * g, lane) + 5 * _round_up(E * g, lane))
    # Conservative estimate of in-kernel f32 temporaries per group-row.
    tmp_row = 32 * E
    budget = 20 * 1024 * 1024                # safe wrt v7x's 64 MiB physical / TC

    if G <= 8:
        tbg = G                              # single full-array block (legal shape)
    else:
        tbg = max(8, (budget // (2 * io_row + tmp_row)) // 8 * 8)
        tbg = min(tbg, 1024)                 # mem-bound roofline flat past ~1k rows
        # Keep >= 2 grid steps (>= 4 when enough work) so both v7x TensorCores
        # get fed through the "parallel" grid axis.
        want = 4 if G >= 32 else 2
        tbg = min(tbg, max(8, _round_up(pl.cdiv(G, want), 8)))

    grid_n = pl.cdiv(G, tbg)
    vmem_limit = int(1.25 * (2 * io_row + tmp_row) * tbg) + (2 << 20)
    vmem_limit = min(max(vmem_limit, 16 << 20), 32 << 20)
    return g, B_pad, G, tbg, grid_n, vmem_limit


def graph_attention_layer(node_type, c_agg, concate_embed, a_agg, p_agg, v_agg,
                          params):
    """Pallas equivalent of GraphAttentionLayer.forward."""
    B, E = c_agg.shape
    assert concate_embed.shape == (B, 4, 2 * E)
    dtype = c_agg.dtype
    itemsize = jnp.dtype(dtype).itemsize

    # Per-node-type attention parameter ([2E, 1] -> [1, 2E], f32 accumulation).
    if node_type == 1:
        att = params["a_neigh_att"]
    elif node_type == 2:
        att = params["p_neigh_att"]
    else:
        att = params["v_neigh_att"]
    att_row = att.reshape(1, 2 * E).astype(jnp.float32)

    g, B_pad, G, tbg, grid_n, vmem_limit = _plan_tiles(B, E, itemsize)

    ce_flat = concate_embed.reshape(B, 8 * E)
    inputs = [ce_flat, c_agg, a_agg, p_agg, v_agg]
    if B_pad != B:
        # Tiny pad (< g <= 8 rows) so the grouped reshape below stays exact.
        pad = ((0, B_pad - B), (0, 0))
        inputs = [jnp.pad(x, pad) for x in inputs]

    # Free, contiguous reshapes into the lane-dense grouped layout.
    ce_g = inputs[0].reshape(G, g * 8 * E)
    aggs_g = [x.reshape(G, g * E) for x in inputs[1:]]

    kernel = functools.partial(gat_kernel, embed_d=E, g_pack=g)
    out_g = pl.pallas_call(
        kernel,
        out_shape=jax.ShapeDtypeStruct((G, g * E), dtype),
        grid_spec=pltpu.PrefetchScalarGridSpec(
            num_scalar_prefetch=0,
            grid=(grid_n,),
            in_specs=[
                pl.BlockSpec((1, 2 * E), lambda i: (0, 0)),          # att vector
                pl.BlockSpec((tbg, g * 8 * E), lambda i: (i, 0)),    # grouped ce
            ] + [pl.BlockSpec((tbg, g * E), lambda i: (i, 0))] * 4,  # c/a/p/v
            out_specs=pl.BlockSpec((tbg, g * E), lambda i: (i, 0)),
        ),
        compiler_params=pltpu.CompilerParams(
            dimension_semantics=("parallel",),
            vmem_limit_bytes=vmem_limit),
    )(att_row, ce_g, *aggs_g)

    out = out_g.reshape(B_pad, E)            # free reshape back to per-row layout
    return out if B_pad == B else out[:B]


def ref_forward(node_type, c_agg, concate_embed, a_agg, p_agg, v_agg, params):
    """Pure-JAX reference mirroring the PyTorch forward (exact)."""
    if node_type == 1:
        att = params["a_neigh_att"]
    elif node_type == 2:
        att = params["p_neigh_att"]
    else:
        att = params["v_neigh_att"]
    s = jnp.einsum("bkj,jl->bkl", concate_embed, att)[..., 0]   # [B, 4]
    s = jnp.where(s > 0, s, NEG_SLOPE * s)                      # LeakyReLU
    w = jax.nn.softmax(s, axis=1)                               # softmax(dim=1)
    stacked = jnp.stack([c_agg, a_agg, p_agg, v_agg], axis=1)   # [B, 4, E]
    return jnp.einsum("bk,bke->be", w, stacked)                 # [B, E]


def _run_case(key, B, E, node_type, dtype=jnp.float32, tol=1e-5):
    params = {
        "a_neigh_att": jnp.ones((2 * E, 1), dtype),   # torch.ones init
        "p_neigh_att": jnp.ones((2 * E, 1), dtype),
        "v_neigh_att": jnp.ones((2 * E, 1), dtype),
    }
    k1, k2, k3, k4, k5 = jax.random.split(key, 5)
    c_agg = jax.random.normal(k1, (B, E), dtype)
    a_agg = jax.random.normal(k2, (B, E), dtype)
    p_agg = jax.random.normal(k3, (B, E), dtype)
    v_agg = jax.random.normal(k4, (B, E), dtype)
    concate_embed = jax.random.normal(k5, (B, 4, 2 * E), dtype)

    out = graph_attention_layer(node_type, c_agg, concate_embed,
                                a_agg, p_agg, v_agg, params)
    out = jax.block_until_ready(out)
    ref = ref_forward(node_type, c_agg, concate_embed, a_agg, p_agg, v_agg, params)
    assert out.shape == (B, E)
    assert jnp.allclose(out, ref, atol=tol, rtol=tol), \
        f"mismatch vs reference (B={B}, E={E})"


if __name__ == "__main__":
    key = jax.random.PRNGKey(0)
    k_a, k_b = jax.random.split(key)

    # Primary small case (E < 128 -> grouped lane-dense path, g = 4).
    _run_case(k_a, B=16, E=32, node_type=1)

    # Secondary case (E >= 128 -> g = 1 path, multi-step "parallel" grid).
    _run_case(k_b, B=32, E=128, node_type=2)

    print("KERNEL_OK")
</pallas_src>

<mosaic_0001>
module attributes {stable_mosaic.version = 11 : i64} {
  func.func @gat_kernel(%arg0: i32, %arg1: memref<1x64xf32, #tpu.memory_space<vmem>>, %arg2: memref<4x1024xf32, #tpu.memory_space<vmem>>, %arg3: memref<4x128xf32, #tpu.memory_space<vmem>>, %arg4: memref<4x128xf32, #tpu.memory_space<vmem>>, %arg5: memref<4x128xf32, #tpu.memory_space<vmem>>, %arg6: memref<4x128xf32, #tpu.memory_space<vmem>>, %arg7: memref<4x128xf32, #tpu.memory_space<vmem>>) attributes {dimension_semantics = [#tpu.dimension_semantics<parallel>], iteration_bounds = array<i64: 1>, scalar_prefetch = 0 : i64, scratch_operands = 0 : i64, tpu.core_type = #tpu.core_type<tc>, window_params = [{pipeline_mode = #tpu.pipeline_mode<synchronous>, transform_indices = @transform_0, window_bounds = array<i64: 1, 64>}, {transform_indices = @transform_1, window_bounds = array<i64: 4, 1024>}, {transform_indices = @transform_2, window_bounds = array<i64: 4, 128>}, {transform_indices = @transform_3, window_bounds = array<i64: 4, 128>}, {transform_indices = @transform_4, window_bounds = array<i64: 4, 128>}, {transform_indices = @transform_5, window_bounds = array<i64: 4, 128>}, {transform_indices = @transform_6, window_bounds = array<i64: 4, 128>}]} {
    %c0 = arith.constant 0 : index
    %c0_0 = arith.constant 0 : index
    %0 = vector.load %arg1[%c0, %c0_0] : memref<1x64xf32, #tpu.memory_space<vmem>>, vector<1x64xf32>
    %c0_1 = arith.constant 0 : index
    %c0_2 = arith.constant 0 : index
    %1 = vector.load %arg2[%c0_1, %c0_2] : memref<4x1024xf32, #tpu.memory_space<vmem>>, vector<4x64xf32>
    %2 = vector.broadcast %0 : vector<1x64xf32> to vector<4x64xf32>
    %3 = arith.mulf %1, %2 : vector<4x64xf32>
    %cst = arith.constant dense<0.000000e+00> : vector<4xf32>
    %4 = vector.multi_reduction <add>, %3, %cst [1] : vector<4x64xf32> to vector<4xf32>
    %5 = vector.shape_cast %4 : vector<4xf32> to vector<4x1xf32>
    %cst_3 = arith.constant 0.000000e+00 : f32
    %6 = vector.broadcast %cst_3 : f32 to vector<4x1xf32>
    %7 = arith.cmpf ogt, %5, %6 : vector<4x1xf32>
    %cst_4 = arith.constant 0.00999999977 : f32
    %8 = vector.broadcast %cst_4 : f32 to vector<4x1xf32>
    %9 = arith.mulf %8, %5 : vector<4x1xf32>
    %10 = arith.select %7, %5, %9 : vector<4x1xi1>, vector<4x1xf32>
    %c0_5 = arith.constant 0 : index
    %c64 = arith.constant 64 : index
    %11 = vector.load %arg2[%c0_5, %c64] : memref<4x1024xf32, #tpu.memory_space<vmem>>, vector<4x64xf32>
    %12 = vector.broadcast %0 : vector<1x64xf32> to vector<4x64xf32>
    %13 = arith.mulf %11, %12 : vector<4x64xf32>
    %cst_6 = arith.constant dense<0.000000e+00> : vector<4xf32>
    %14 = vector.multi_reduction <add>, %13, %cst_6 [1] : vector<4x64xf32> to vector<4xf32>
    %15 = vector.shape_cast %14 : vector<4xf32> to vector<4x1xf32>
    %cst_7 = arith.constant 0.000000e+00 : f32
    %16 = vector.broadcast %cst_7 : f32 to vector<4x1xf32>
    %17 = arith.cmpf ogt, %15, %16 : vector<4x1xf32>
    %cst_8 = arith.constant 0.00999999977 : f32
    %18 = vector.broadcast %cst_8 : f32 to vector<4x1xf32>
    %19 = arith.mulf %18, %15 : vector<4x1xf32>
    %20 = arith.select %17, %15, %19 : vector<4x1xi1>, vector<4x1xf32>
    %c0_9 = arith.constant 0 : index
    %c128 = arith.constant 128 : index
    %21 = vector.load %arg2[%c0_9, %c128] : memref<4x1024xf32, #tpu.memory_space<vmem>>, vector<4x64xf32>
    %22 = vector.broadcast %0 : vector<1x64xf32> to vector<4x64xf32>
    %23 = arith.mulf %21, %22 : vector<4x64xf32>
    %cst_10 = arith.constant dense<0.000000e+00> : vector<4xf32>
    %24 = vector.multi_reduction <add>, %23, %cst_10 [1] : vector<4x64xf32> to vector<4xf32>
    %25 = vector.shape_cast %24 : vector<4xf32> to vector<4x1xf32>
    %cst_11 = arith.constant 0.000000e+00 : f32
    %26 = vector.broadcast %cst_11 : f32 to vector<4x1xf32>
    %27 = arith.cmpf ogt, %25, %26 : vector<4x1xf32>
    %cst_12 = arith.constant 0.00999999977 : f32
    %28 = vector.broadcast %cst_12 : f32 to vector<4x1xf32>
    %29 = arith.mulf %28, %25 : vector<4x1xf32>
    %30 = arith.select %27, %25, %29 : vector<4x1xi1>, vector<4x1xf32>
    %c0_13 = arith.constant 0 : index
    %c192 = arith.constant 192 : index
    %31 = vector.load %arg2[%c0_13, %c192] : memref<4x1024xf32, #tpu.memory_space<vmem>>, vector<4x64xf32>
    %32 = vector.broadcast %0 : vector<1x64xf32> to vector<4x64xf32>
    %33 = arith.mulf %31, %32 : vector<4x64xf32>
    %cst_14 = arith.constant dense<0.000000e+00> : vector<4xf32>
    %34 = vector.multi_reduction <add>, %33, %cst_14 [1] : vector<4x64xf32> to vector<4xf32>
    %35 = vector.shape_cast %34 : vector<4xf32> to vector<4x1xf32>
    %cst_15 = arith.constant 0.000000e+00 : f32
    %36 = vector.broadcast %cst_15 : f32 to vector<4x1xf32>
    %37 = arith.cmpf ogt, %35, %36 : vector<4x1xf32>
    %cst_16 = arith.constant 0.00999999977 : f32
    %38 = vector.broadcast %cst_16 : f32 to vector<4x1xf32>
    %39 = arith.mulf %38, %35 : vector<4x1xf32>
    %40 = arith.select %37, %35, %39 : vector<4x1xi1>, vector<4x1xf32>
    %41 = arith.maximumf %10, %20 : vector<4x1xf32>
    %42 = arith.maximumf %30, %40 : vector<4x1xf32>
    %43 = arith.maximumf %41, %42 : vector<4x1xf32>
    %44 = arith.subf %10, %43 : vector<4x1xf32>
    %45 = math.exp %44 : vector<4x1xf32>
    %46 = arith.subf %20, %43 : vector<4x1xf32>
    %47 = math.exp %46 : vector<4x1xf32>
    %48 = arith.subf %30, %43 : vector<4x1xf32>
    %49 = math.exp %48 : vector<4x1xf32>
    %50 = arith.subf %40, %43 : vector<4x1xf32>
    %51 = math.exp %50 : vector<4x1xf32>
    %52 = arith.addf %45, %47 : vector<4x1xf32>
    %53 = arith.addf %52, %49 : vector<4x1xf32>
    %54 = arith.addf %53, %51 : vector<4x1xf32>
    %cst_17 = arith.constant 1.000000e+00 : f32
    %55 = vector.broadcast %cst_17 : f32 to vector<4x1xf32>
    %56 = arith.divf %55, %54 : vector<4x1xf32>
    %57 = arith.mulf %45, %56 : vector<4x1xf32>
    %c0_18 = arith.constant 0 : index
    %c0_19 = arith.constant 0 : index
    %58 = vector.load %arg3[%c0_18, %c0_19] : memref<4x128xf32, #tpu.memory_space<vmem>>, vector<4x32xf32>
    %59 = vector.broadcast %57 : vector<4x1xf32> to vector<4x32xf32>
    %60 = arith.mulf %59, %58 : vector<4x32xf32>
    %61 = arith.mulf %47, %56 : vector<4x1xf32>
    %c0_20 = arith.constant 0 : index
    %c0_21 = arith.constant 0 : index
    %62 = vector.load %arg4[%c0_20, %c0_21] : memref<4x128xf32, #tpu.memory_space<vmem>>, vector<4x32xf32>
    %63 = vector.broadcast %61 : vector<4x1xf32> to vector<4x32xf32>
    %64 = arith.mulf %63, %62 : vector<4x32xf32>
    %65 = arith.addf %60, %64 : vector<4x32xf32>
    %66 = arith.mulf %49, %56 : vector<4x1xf32>
    %c0_22 = arith.constant 0 : index
    %c0_23 = arith.constant 0 : index
    %67 = vector.load %arg5[%c0_22, %c0_23] : memref<4x128xf32, #tpu.memory_space<vmem>>, vector<4x32xf32>
    %68 = vector.broadcast %66 : vector<4x1xf32> to vector<4x32xf32>
    %69 = arith.mulf %68, %67 : vector<4x32xf32>
    %70 = arith.addf %65, %69 : vector<4x32xf32>
    %71 = arith.mulf %51, %56 : vector<4x1xf32>
    %c0_24 = arith.constant 0 : index
    %c0_25 = arith.constant 0 : index
    %72 = vector.load %arg6[%c0_24, %c0_25] : memref<4x128xf32, #tpu.memory_space<vmem>>, vector<4x32xf32>
    %73 = vector.broadcast %71 : vector<4x1xf32> to vector<4x32xf32>
    %74 = arith.mulf %73, %72 : vector<4x32xf32>
    %75 = arith.addf %70, %74 : vector<4x32xf32>
    %c0_26 = arith.constant 0 : index
    %c0_27 = arith.constant 0 : index
    %76 = vector.load %arg7[%c0_26, %c0_27] : memref<4x128xf32, #tpu.memory_space<vmem>>, vector<4x32xf32>
    tpu.vector_store %arg7[%c0_26, %c0_27], %75 {strides = array<i32>} : memref<4x128xf32, #tpu.memory_space<vmem>>, vector<4x32xf32>,
    %c0_28 = arith.constant 0 : index
    %c256 = arith.constant 256 : index
    %77 = vector.load %arg2[%c0_28, %c256] : memref<4x1024xf32, #tpu.memory_space<vmem>>, vector<4x64xf32>
    %78 = vector.broadcast %0 : vector<1x64xf32> to vector<4x64xf32>
    %79 = arith.mulf %77, %78 : vector<4x64xf32>
    %cst_29 = arith.constant dense<0.000000e+00> : vector<4xf32>
    %80 = vector.multi_reduction <add>, %79, %cst_29 [1] : vector<4x64xf32> to vector<4xf32>
    %81 = vector.shape_cast %80 : vector<4xf32> to vector<4x1xf32>
    %cst_30 = arith.constant 0.000000e+00 : f32
    %82 = vector.broadcast %cst_30 : f32 to vector<4x1xf32>
    %83 = arith.cmpf ogt, %81, %82 : vector<4x1xf32>
    %cst_31 = arith.constant 0.00999999977 : f32
    %84 = vector.broadcast %cst_31 : f32 to vector<4x1xf32>
    %85 = arith.mulf %84, %81 : vector<4x1xf32>
    %86 = arith.select %83, %81, %85 : vector<4x1xi1>, vector<4x1xf32>
    %c0_32 = arith.constant 0 : index
    %c320 = arith.constant 320 : index
    %87 = vector.load %arg2[%c0_32, %c320] : memref<4x1024xf32, #tpu.memory_space<vmem>>, vector<4x64xf32>
    %88 = vector.broadcast %0 : vector<1x64xf32> to vector<4x64xf32>
    %89 = arith.mulf %87, %88 : vector<4x64xf32>
    %cst_33 = arith.constant dense<0.000000e+00> : vector<4xf32>
    %90 = vector.multi_reduction <add>, %89, %cst_33 [1] : vector<4x64xf32> to vector<4xf32>
    %91 = vector.shape_cast %90 : vector<4xf32> to vector<4x1xf32>
    %cst_34 = arith.constant 0.000000e+00 : f32
    %92 = vector.broadcast %cst_34 : f32 to vector<4x1xf32>
    %93 = arith.cmpf ogt, %91, %92 : vector<4x1xf32>
    %cst_35 = arith.constant 0.00999999977 : f32
    %94 = vector.broadcast %cst_35 : f32 to vector<4x1xf32>
    %95 = arith.mulf %94, %91 : vector<4x1xf32>
    %96 = arith.select %93, %91, %95 : vector<4x1xi1>, vector<4x1xf32>
    %c0_36 = arith.constant 0 : index
    %c384 = arith.constant 384 : index
    %97 = vector.load %arg2[%c0_36, %c384] : memref<4x1024xf32, #tpu.memory_space<vmem>>, vector<4x64xf32>
    %98 = vector.broadcast %0 : vector<1x64xf32> to vector<4x64xf32>
    %99 = arith.mulf %97, %98 : vector<4x64xf32>
    %cst_37 = arith.constant dense<0.000000e+00> : vector<4xf32>
    %100 = vector.multi_reduction <add>, %99, %cst_37 [1] : vector<4x64xf32> to vector<4xf32>
    %101 = vector.shape_cast %100 : vector<4xf32> to vector<4x1xf32>
    %cst_38 = arith.constant 0.000000e+00 : f32
    %102 = vector.broadcast %cst_38 : f32 to vector<4x1xf32>
    %103 = arith.cmpf ogt, %101, %102 : vector<4x1xf32>
    %cst_39 = arith.constant 0.00999999977 : f32
    %104 = vector.broadcast %cst_39 : f32 to vector<4x1xf32>
    %105 = arith.mulf %104, %101 : vector<4x1xf32>
    %106 = arith.select %103, %101, %105 : vector<4x1xi1>, vector<4x1xf32>
    %c0_40 = arith.constant 0 : index
    %c448 = arith.constant 448 : index
    %107 = vector.load %arg2[%c0_40, %c448] : memref<4x1024xf32, #tpu.memory_space<vmem>>, vector<4x64xf32>
    %108 = vector.broadcast %0 : vector<1x64xf32> to vector<4x64xf32>
    %109 = arith.mulf %107, %108 : vector<4x64xf32>
    %cst_41 = arith.constant dense<0.000000e+00> : vector<4xf32>
    %110 = vector.multi_reduction <add>, %109, %cst_41 [1] : vector<4x64xf32> to vector<4xf32>
    %111 = vector.shape_cast %110 : vector<4xf32> to vector<4x1xf32>
    %cst_42 = arith.constant 0.000000e+00 : f32
    %112 = vector.broadcast %cst_42 : f32 to vector<4x1xf32>
    %113 = arith.cmpf ogt, %111, %112 : vector<4x1xf32>
    %cst_43 = arith.constant 0.00999999977 : f32
    %114 = vector.broadcast %cst_43 : f32 to vector<4x1xf32>
    %115 = arith.mulf %114, %111 : vector<4x1xf32>
    %116 = arith.select %113, %111, %115 : vector<4x1xi1>, vector<4x1xf32>
    %117 = arith.maximumf %86, %96 : vector<4x1xf32>
    %118 = arith.maximumf %106, %116 : vector<4x1xf32>
    %119 = arith.maximumf %117, %118 : vector<4x1xf32>
    %120 = arith.subf %86, %119 : vector<4x1xf32>
    %121 = math.exp %120 : vector<4x1xf32>
    %122 = arith.subf %96, %119 : vector<4x1xf32>
    %123 = math.exp %122 : vector<4x1xf32>
    %124 = arith.subf %106, %119 : vector<4x1xf32>
    %125 = math.exp %124 : vector<4x1xf32>
    %126 = arith.subf %116, %119 : vector<4x1xf32>
    %127 = math.exp %126 : vector<4x1xf32>
    %128 = arith.addf %121, %123 : vector<4x1xf32>
    %129 = arith.addf %128, %125 : vector<4x1xf32>
    %130 = arith.addf %129, %127 : vector<4x1xf32>
    %cst_44 = arith.constant 1.000000e+00 : f32
    %131 = vector.broadcast %cst_44 : f32 to vector<4x1xf32>
    %132 = arith.divf %131, %130 : vector<4x1xf32>
    %133 = arith.mulf %121, %132 : vector<4x1xf32>
    %c0_45 = arith.constant 0 : index
    %c32 = arith.constant 32 : index
    %134 = vector.load %arg3[%c0_45, %c32] : memref<4x128xf32, #tpu.memory_space<vmem>>, vector<4x32xf32>
    %135 = vector.broadcast %133 : vector<4x1xf32> to vector<4x32xf32>
    %136 = arith.mulf %135, %134 : vector<4x32xf32>
    %137 = arith.mulf %123, %132 : vector<4x1xf32>
    %c0_46 = arith.constant 0 : index
    %c32_47 = arith.constant 32 : index
    %138 = vector.load %arg4[%c0_46, %c32_47] : memref<4x128xf32, #tpu.memory_space<vmem>>, vector<4x32xf32>
    %139 = vector.broadcast %137 : vector<4x1xf32> to vector<4x32xf32>
    %140 = arith.mulf %139, %138 : vector<4x32xf32>
    %141 = arith.addf %136, %140 : vector<4x32xf32>
    %142 = arith.mulf %125, %132 : vector<4x1xf32>
    %c0_48 = arith.constant 0 : index
    %c32_49 = arith.constant 32 : index
    %143 = vector.load %arg5[%c0_48, %c32_49] : memref<4x128xf32, #tpu.memory_space<vmem>>, vector<4x32xf32>
    %144 = vector.broadcast %142 : vector<4x1xf32> to vector<4x32xf32>
    %145 = arith.mulf %144, %143 : vector<4x32xf32>
    %146 = arith.addf %141, %145 : vector<4x32xf32>
    %147 = arith.mulf %127, %132 : vector<4x1xf32>
    %c0_50 = arith.constant 0 : index
    %c32_51 = arith.constant 32 : index
    %148 = vector.load %arg6[%c0_50, %c32_51] : memref<4x128xf32, #tpu.memory_space<vmem>>, vector<4x32xf32>
    %149 = vector.broadcast %147 : vector<4x1xf32> to vector<4x32xf32>
    %150 = arith.mulf %149, %148 : vector<4x32xf32>
    %151 = arith.addf %146, %150 : vector<4x32xf32>
    %c0_52 = arith.constant 0 : index
    %c32_53 = arith.constant 32 : index
    %152 = vector.load %arg7[%c0_52, %c32_53] : memref<4x128xf32, #tpu.memory_space<vmem>>, vector<4x32xf32>
    tpu.vector_store %arg7[%c0_52, %c32_53], %151 {strides = array<i32>} : memref<4x128xf32, #tpu.memory_space<vmem>>, vector<4x32xf32>,
    %c0_54 = arith.constant 0 : index
    %c512 = arith.constant 512 : index
    %153 = vector.load %arg2[%c0_54, %c512] : memref<4x1024xf32, #tpu.memory_space<vmem>>, vector<4x64xf32>
    %154 = vector.broadcast %0 : vector<1x64xf32> to vector<4x64xf32>
    %155 = arith.mulf %153, %154 : vector<4x64xf32>
    %cst_55 = arith.constant dense<0.000000e+00> : vector<4xf32>
    %156 = vector.multi_reduction <add>, %155, %cst_55 [1] : vector<4x64xf32> to vector<4xf32>
    %157 = vector.shape_cast %156 : vector<4xf32> to vector<4x1xf32>
    %cst_56 = arith.constant 0.000000e+00 : f32
    %158 = vector.broadcast %cst_56 : f32 to vector<4x1xf32>
    %159 = arith.cmpf ogt, %157, %158 : vector<4x1xf32>
    %cst_57 = arith.constant 0.00999999977 : f32
    %160 = vector.broadcast %cst_57 : f32 to vector<4x1xf32>
    %161 = arith.mulf %160, %157 : vector<4x1xf32>
    %162 = arith.select %159, %157, %161 : vector<4x1xi1>, vector<4x1xf32>
    %c0_58 = arith.constant 0 : index
    %c576 = arith.constant 576 : index
    %163 = vector.load %arg2[%c0_58, %c576] : memref<4x1024xf32, #tpu.memory_space<vmem>>, vector<4x64xf32>
    %164 = vector.broadcast %0 : vector<1x64xf32> to vector<4x64xf32>
    %165 = arith.mulf %163, %164 : vector<4x64xf32>
    %cst_59 = arith.constant dense<0.000000e+00> : vector<4xf32>
    %166 = vector.multi_reduction <add>, %165, %cst_59 [1] : vector<4x64xf32> to vector<4xf32>
    %167 = vector.shape_cast %166 : vector<4xf32> to vector<4x1xf32>
    %cst_60 = arith.constant 0.000000e+00 : f32
    %168 = vector.broadcast %cst_60 : f32 to vector<4x1xf32>
    %169 = arith.cmpf ogt, %167, %168 : vector<4x1xf32>
    %cst_61 = arith.constant 0.00999999977 : f32
    %170 = vector.broadcast %cst_61 : f32 to vector<4x1xf32>
    %171 = arith.mulf %170, %167 : vector<4x1xf32>
    %172 = arith.select %169, %167, %171 : vector<4x1xi1>, vector<4x1xf32>
    %c0_62 = arith.constant 0 : index
    %c640 = arith.constant 640 : index
    %173 = vector.load %arg2[%c0_62, %c640] : memref<4x1024xf32, #tpu.memory_space<vmem>>, vector<4x64xf32>
    %174 = vector.broadcast %0 : vector<1x64xf32> to vector<4x64xf32>
    %175 = arith.mulf %173, %174 : vector<4x64xf32>
    %cst_63 = arith.constant dense<0.000000e+00> : vector<4xf32>
    %176 = vector.multi_reduction <add>, %175, %cst_63 [1] : vector<4x64xf32> to vector<4xf32>
    %177 = vector.shape_cast %176 : vector<4xf32> to vector<4x1xf32>
    %cst_64 = arith.constant 0.000000e+00 : f32
    %178 = vector.broadcast %cst_64 : f32 to vector<4x1xf32>
    %179 = arith.cmpf ogt, %177, %178 : vector<4x1xf32>
    %cst_65 = arith.constant 0.00999999977 : f32
    %180 = vector.broadcast %cst_65 : f32 to vector<4x1xf32>
    %181 = arith.mulf %180, %177 : vector<4x1xf32>
    %182 = arith.select %179, %177, %181 : vector<4x1xi1>, vector<4x1xf32>
    %c0_66 = arith.constant 0 : index
    %c704 = arith.constant 704 : index
    %183 = vector.load %arg2[%c0_66, %c704] : memref<4x1024xf32, #tpu.memory_space<vmem>>, vector<4x64xf32>
    %184 = vector.broadcast %0 : vector<1x64xf32> to vector<4x64xf32>
    %185 = arith.mulf %183, %184 : vector<4x64xf32>
    %cst_67 = arith.constant dense<0.000000e+00> : vector<4xf32>
    %186 = vector.multi_reduction <add>, %185, %cst_67 [1] : vector<4x64xf32> to vector<4xf32>
    %187 = vector.shape_cast %186 : vector<4xf32> to vector<4x1xf32>
    %cst_68 = arith.constant 0.000000e+00 : f32
    %188 = vector.broadcast %cst_68 : f32 to vector<4x1xf32>
    %189 = arith.cmpf ogt, %187, %188 : vector<4x1xf32>
    %cst_69 = arith.constant 0.00999999977 : f32
    %190 = vector.broadcast %cst_69 : f32 to vector<4x1xf32>
    %191 = arith.mulf %190, %187 : vector<4x1xf32>
    %192 = arith.select %189, %187, %191 : vector<4x1xi1>, vector<4x1xf32>
    %193 = arith.maximumf %162, %172 : vector<4x1xf32>
    %194 = arith.maximumf %182, %192 : vector<4x1xf32>
    %195 = arith.maximumf %193, %194 : vector<4x1xf32>
    %196 = arith.subf %162, %195 : vector<4x1xf32>
    %197 = math.exp %196 : vector<4x1xf32>
    %198 = arith.subf %172, %195 : vector<4x1xf32>
    %199 = math.exp %198 : vector<4x1xf32>
    %200 = arith.subf %182, %195 : vector<4x1xf32>
    %201 = math.exp %200 : vector<4x1xf32>
    %202 = arith.subf %192, %195 : vector<4x1xf32>
    %203 = math.exp %202 : vector<4x1xf32>
    %204 = arith.addf %197, %199 : vector<4x1xf32>
    %205 = arith.addf %204, %201 : vector<4x1xf32>
    %206 = arith.addf %205, %203 : vector<4x1xf32>
    %cst_70 = arith.constant 1.000000e+00 : f32
    %207 = vector.broadcast %cst_70 : f32 to vector<4x1xf32>
    %208 = arith.divf %207, %206 : vector<4x1xf32>
    %209 = arith.mulf %197, %208 : vector<4x1xf32>
    %c0_71 = arith.constant 0 : index
    %c64_72 = arith.constant 64 : index
    %210 = vector.load %arg3[%c0_71, %c64_72] : memref<4x128xf32, #tpu.memory_space<vmem>>, vector<4x32xf32>
    %211 = vector.broadcast %209 : vector<4x1xf32> to vector<4x32xf32>
    %212 = arith.mulf %211, %210 : vector<4x32xf32>
    %213 = arith.mulf %199, %208 : vector<4x1xf32>
    %c0_73 = arith.constant 0 : index
    %c64_74 = arith.constant 64 : index
    %214 = vector.load %arg4[%c0_73, %c64_74] : memref<4x128xf32, #tpu.memory_space<vmem>>, vector<4x32xf32>
    %215 = vector.broadcast %213 : vector<4x1xf32> to vector<4x32xf32>
    %216 = arith.mulf %215, %214 : vector<4x32xf32>
    %217 = arith.addf %212, %216 : vector<4x32xf32>
    %218 = arith.mulf %201, %208 : vector<4x1xf32>
    %c0_75 = arith.constant 0 : index
    %c64_76 = arith.constant 64 : index
    %219 = vector.load %arg5[%c0_75, %c64_76] : memref<4x128xf32, #tpu.memory_space<vmem>>, vector<4x32xf32>
    %220 = vector.broadcast %218 : vector<4x1xf32> to vector<4x32xf32>
    %221 = arith.mulf %220, %219 : vector<4x32xf32>
    %222 = arith.addf %217, %221 : vector<4x32xf32>
    %223 = arith.mulf %203, %208 : vector<4x1xf32>
    %c0_77 = arith.constant 0 : index
    %c64_78 = arith.constant 64 : index
    %224 = vector.load %arg6[%c0_77, %c64_78] : memref<4x128xf32, #tpu.memory_space<vmem>>, vector<4x32xf32>
    %225 = vector.broadcast %223 : vector<4x1xf32> to vector<4x32xf32>
    %226 = arith.mulf %225, %224 : vector<4x32xf32>
    %227 = arith.addf %222, %226 : vector<4x32xf32>
    %c0_79 = arith.constant 0 : index
    %c64_80 = arith.constant 64 : index
    %228 = vector.load %arg7[%c0_79, %c64_80] : memref<4x128xf32, #tpu.memory_space<vmem>>, vector<4x32xf32>
    tpu.vector_store %arg7[%c0_79, %c64_80], %227 {strides = array<i32>} : memref<4x128xf32, #tpu.memory_space<vmem>>, vector<4x32xf32>,
    %c0_81 = arith.constant 0 : index
    %c768 = arith.constant 768 : index
    %229 = vector.load %arg2[%c0_81, %c768] : memref<4x1024xf32, #tpu.memory_space<vmem>>, vector<4x64xf32>
    %230 = vector.broadcast %0 : vector<1x64xf32> to vector<4x64xf32>
    %231 = arith.mulf %229, %230 : vector<4x64xf32>
    %cst_82 = arith.constant dense<0.000000e+00> : vector<4xf32>
    %232 = vector.multi_reduction <add>, %231, %cst_82 [1] : vector<4x64xf32> to vector<4xf32>
    %233 = vector.shape_cast %232 : vector<4xf32> to vector<4x1xf32>
    %cst_83 = arith.constant 0.000000e+00 : f32
    %234 = vector.broadcast %cst_83 : f32 to vector<4x1xf32>
    %235 = arith.cmpf ogt, %233, %234 : vector<4x1xf32>
    %cst_84 = arith.constant 0.00999999977 : f32
    %236 = vector.broadcast %cst_84 : f32 to vector<4x1xf32>
    %237 = arith.mulf %236, %233 : vector<4x1xf32>
    %238 = arith.select %235, %233, %237 : vector<4x1xi1>, vector<4x1xf32>
    %c0_85 = arith.constant 0 : index
    %c832 = arith.constant 832 : index
    %239 = vector.load %arg2[%c0_85, %c832] : memref<4x1024xf32, #tpu.memory_space<vmem>>, vector<4x64xf32>
    %240 = vector.broadcast %0 : vector<1x64xf32> to vector<4x64xf32>
    %241 = arith.mulf %239, %240 : vector<4x64xf32>
    %cst_86 = arith.constant dense<0.000000e+00> : vector<4xf32>
    %242 = vector.multi_reduction <add>, %241, %cst_86 [1] : vector<4x64xf32> to vector<4xf32>
    %243 = vector.shape_cast %242 : vector<4xf32> to vector<4x1xf32>
    %cst_87 = arith.constant 0.000000e+00 : f32
    %244 = vector.broadcast %cst_87 : f32 to vector<4x1xf32>
    %245 = arith.cmpf ogt, %243, %244 : vector<4x1xf32>
    %cst_88 = arith.constant 0.00999999977 : f32
    %246 = vector.broadcast %cst_88 : f32 to vector<4x1xf32>
    %247 = arith.mulf %246, %243 : vector<4x1xf32>
    %248 = arith.select %245, %243, %247 : vector<4x1xi1>, vector<4x1xf32>
    %c0_89 = arith.constant 0 : index
    %c896 = arith.constant 896 : index
    %249 = vector.load %arg2[%c0_89, %c896] : memref<4x1024xf32, #tpu.memory_space<vmem>>, vector<4x64xf32>
    %250 = vector.broadcast %0 : vector<1x64xf32> to vector<4x64xf32>
    %251 = arith.mulf %249, %250 : vector<4x64xf32>
    %cst_90 = arith.constant dense<0.000000e+00> : vector<4xf32>
    %252 = vector.multi_reduction <add>, %251, %cst_90 [1] : vector<4x64xf32> to vector<4xf32>
    %253 = vector.shape_cast %252 : vector<4xf32> to vector<4x1xf32>
    %cst_91 = arith.constant 0.000000e+00 : f32
    %254 = vector.broadcast %cst_91 : f32 to vector<4x1xf32>
    %255 = arith.cmpf ogt, %253, %254 : vector<4x1xf32>
    %cst_92 = arith.constant 0.00999999977 : f32
    %256 = vector.broadcast %cst_92 : f32 to vector<4x1xf32>
    %257 = arith.mulf %256, %253 : vector<4x1xf32>
    %258 = arith.select %255, %253, %257 : vector<4x1xi1>, vector<4x1xf32>
    %c0_93 = arith.constant 0 : index
    %c960 = arith.constant 960 : index
    %259 = vector.load %arg2[%c0_93, %c960] : memref<4x1024xf32, #tpu.memory_space<vmem>>, vector<4x64xf32>
    %260 = vector.broadcast %0 : vector<1x64xf32> to vector<4x64xf32>
    %261 = arith.mulf %259, %260 : vector<4x64xf32>
    %cst_94 = arith.constant dense<0.000000e+00> : vector<4xf32>
    %262 = vector.multi_reduction <add>, %261, %cst_94 [1] : vector<4x64xf32> to vector<4xf32>
    %263 = vector.shape_cast %262 : vector<4xf32> to vector<4x1xf32>
    %cst_95 = arith.constant 0.000000e+00 : f32
    %264 = vector.broadcast %cst_95 : f32 to vector<4x1xf32>
    %265 = arith.cmpf ogt, %263, %264 : vector<4x1xf32>
    %cst_96 = arith.constant 0.00999999977 : f32
    %266 = vector.broadcast %cst_96 : f32 to vector<4x1xf32>
    %267 = arith.mulf %266, %263 : vector<4x1xf32>
    %268 = arith.select %265, %263, %267 : vector<4x1xi1>, vector<4x1xf32>
    %269 = arith.maximumf %238, %248 : vector<4x1xf32>
    %270 = arith.maximumf %258, %268 : vector<4x1xf32>
    %271 = arith.maximumf %269, %270 : vector<4x1xf32>
    %272 = arith.subf %238, %271 : vector<4x1xf32>
    %273 = math.exp %272 : vector<4x1xf32>
    %274 = arith.subf %248, %271 : vector<4x1xf32>
    %275 = math.exp %274 : vector<4x1xf32>
    %276 = arith.subf %258, %271 : vector<4x1xf32>
    %277 = math.exp %276 : vector<4x1xf32>
    %278 = arith.subf %268, %271 : vector<4x1xf32>
    %279 = math.exp %278 : vector<4x1xf32>
    %280 = arith.addf %273, %275 : vector<4x1xf32>
    %281 = arith.addf %280, %277 : vector<4x1xf32>
    %282 = arith.addf %281, %279 : vector<4x1xf32>
    %cst_97 = arith.constant 1.000000e+00 : f32
    %283 = vector.broadcast %cst_97 : f32 to vector<4x1xf32>
    %284 = arith.divf %283, %282 : vector<4x1xf32>
    %285 = arith.mulf %273, %284 : vector<4x1xf32>
    %c0_98 = arith.constant 0 : index
    %c96 = arith.constant 96 : index
    %286 = vector.load %arg3[%c0_98, %c96] : memref<4x128xf32, #tpu.memory_space<vmem>>, vector<4x32xf32>
    %287 = vector.broadcast %285 : vector<4x1xf32> to vector<4x32xf32>
    %288 = arith.mulf %287, %286 : vector<4x32xf32>
    %289 = arith.mulf %275, %284 : vector<4x1xf32>
    %c0_99 = arith.constant 0 : index
    %c96_100 = arith.constant 96 : index
    %290 = vector.load %arg4[%c0_99, %c96_100] : memref<4x128xf32, #tpu.memory_space<vmem>>, vector<4x32xf32>
    %291 = vector.broadcast %289 : vector<4x1xf32> to vector<4x32xf32>
    %292 = arith.mulf %291, %290 : vector<4x32xf32>
    %293 = arith.addf %288, %292 : vector<4x32xf32>
    %294 = arith.mulf %277, %284 : vector<4x1xf32>
    %c0_101 = arith.constant 0 : index
    %c96_102 = arith.constant 96 : index
    %295 = vector.load %arg5[%c0_101, %c96_102] : memref<4x128xf32, #tpu.memory_space<vmem>>, vector<4x32xf32>
    %296 = vector.broadcast %294 : vector<4x1xf32> to vector<4x32xf32>
    %297 = arith.mulf %296, %295 : vector<4x32xf32>
    %298 = arith.addf %293, %297 : vector<4x32xf32>
    %299 = arith.mulf %279, %284 : vector<4x1xf32>
    %c0_103 = arith.constant 0 : index
    %c96_104 = arith.constant 96 : index
    %300 = vector.load %arg6[%c0_103, %c96_104] : memref<4x128xf32, #tpu.memory_space<vmem>>, vector<4x32xf32>
    %301 = vector.broadcast %299 : vector<4x1xf32> to vector<4x32xf32>
    %302 = arith.mulf %301, %300 : vector<4x32xf32>
    %303 = arith.addf %298, %302 : vector<4x32xf32>
    %c0_105 = arith.constant 0 : index
    %c96_106 = arith.constant 96 : index
    %304 = vector.load %arg7[%c0_105, %c96_106] : memref<4x128xf32, #tpu.memory_space<vmem>>, vector<4x32xf32>
    tpu.vector_store %arg7[%c0_105, %c96_106], %303 {strides = array<i32>} : memref<4x128xf32, #tpu.memory_space<vmem>>, vector<4x32xf32>,
    return
  }
  func.func @transform_0(%arg0: i32) -> (i32, i32) {
    %c0_i32 = arith.constant 0 : i32
    %c0_i32_0 = arith.constant 0 : i32
    %c0_i32_1 = arith.constant 0 : i32
    return %c0_i32, %c0_i32_0 : i32, i32
  }
  func.func @transform_1(%arg0: i32) -> (i32, i32) {
    %c0_i32 = arith.constant 0 : i32
    %c0_i32_0 = arith.constant 0 : i32
    return %arg0, %c0_i32 : i32, i32
  }
  func.func @transform_2(%arg0: i32) -> (i32, i32) {
    %c0_i32 = arith.constant 0 : i32
    %c0_i32_0 = arith.constant 0 : i32
    return %arg0, %c0_i32 : i32, i32
  }
  func.func @transform_3(%arg0: i32) -> (i32, i32) {
    %c0_i32 = arith.constant 0 : i32
    %c0_i32_0 = arith.constant 0 : i32
    return %arg0, %c0_i32 : i32, i32
  }
  func.func @transform_4(%arg0: i32) -> (i32, i32) {
    %c0_i32 = arith.constant 0 : i32
    %c0_i32_0 = arith.constant 0 : i32
    return %arg0, %c0_i32 : i32, i32
  }
  func.func @transform_5(%arg0: i32) -> (i32, i32) {
    %c0_i32 = arith.constant 0 : i32
    %c0_i32_0 = arith.constant 0 : i32
    return %arg0, %c0_i32 : i32, i32
  }
  func.func @transform_6(%arg0: i32) -> (i32, i32) {
    %c0_i32 = arith.constant 0 : i32
    %c0_i32_0 = arith.constant 0 : i32
    return %arg0, %c0_i32 : i32, i32
  }
}

</mosaic_0001>

<llo_original>
// kernel: tpu_custom_call.1
$region0: #{tpu_custom_call.1}
  #allocation0 [shape = 'u32[]', space=smem, size = 0x4, offset = 0x4, fixed_abs, tag = 'smem constant byte address 0x4 - core index']
  #allocation1 [shape = 'u32[72,128]{1,0:T(1,128)}', space=vmem, size = 0x9000, scoped, tag = 'internal scratch']
  %s0 = inlined_call_operand.hbm [shape: f32[1,64], index: 0, kind: input, shape index: {}]
  %s1 = inlined_call_operand.hbm [shape: f32[4,1024], index: 1, kind: input, shape index: {}]
  %s2 = inlined_call_operand.hbm [shape: f32[4,128], index: 2, kind: input, shape index: {}]
  %s3 = inlined_call_operand.hbm [shape: f32[4,128], index: 3, kind: input, shape index: {}]
  %s4 = inlined_call_operand.hbm [shape: f32[4,128], index: 4, kind: input, shape index: {}]
  %s5 = inlined_call_operand.vmem [shape: f32[4,128], index: 5, kind: input, shape index: {}]
  %s6 = inlined_call_operand.hbm [shape: f32[4,128], index: 6, kind: output, shape index: {}]
  %s7 = sld [smem:[#allocation0]]
  $region54: #{tpu_custom_call.1} parent=0
    _
  %s9 = ssub.s32 1, %s7
  %s10 = scalar_select 0, %s9, %s7
  $region1: #{tpu_custom_call.1} parent=0
    #allocation2 [shape = 'u8[512]{0}', space=vmem, size = 0x400, scoped, tag = 'input window, operand 0, single buffered']
    #allocation3 [shape = 's32[1]{0}', space=sflag, size = 0x4, scoped, tag = 'scoped memory for tpu_custom_call.1']
    #allocation4 [shape = 's32[1]{0}', space=sflag, size = 0x4, scoped, tag = 'scoped memory for tpu_custom_call.1']
    #allocation5 [shape = 'u8[16384]{0}', space=vmem, size = 0x4000, scoped, tag = 'input window, operand 1, single buffered']
    #allocation6 [shape = 's32[1]{0}', space=sflag, size = 0x4, scoped, tag = 'scoped memory for tpu_custom_call.1']
    #allocation7 [shape = 'u8[2048]{0}', space=vmem, size = 0x800, scoped, tag = 'input window, operand 2, single buffered']
    #allocation8 [shape = 'u8[2048]{0}', space=vmem, size = 0x800, scoped, tag = 'input window, operand 3, single buffered']
    #allocation9 [shape = 's32[1]{0}', space=sflag, size = 0x4, scoped, tag = 'scoped memory for tpu_custom_call.1']
    #allocation10 [shape = 'u8[2048]{0}', space=vmem, size = 0x800, scoped, tag = 'input window, operand 4, single buffered']
    #allocation11 [shape = 'u8[2048]{0}', space=vmem, size = 0x800, scoped, tag = 'output window, operand 0, single buffered']
    %11 = vsyncpa [#allocation3], 0
    %12 = vsyncpa [#allocation6], 0
    %13 = vsyncpa [#allocation9], 0
    %14 = vsyncpa [#allocation4], 0
    // Predicated region
    $region2: #{tpu_custom_call.1} parent=1 // pred_check
      _
    $region3: #{tpu_custom_call.1} parent=1 // pred_check_branch
      %16 = sbr.rel (0) target = $region5
    $region4: #{tpu_custom_call.1} parent=1 // pred_region
      %18 = vsyncadd [#allocation3], 0
      %s20 = sshll.u32 %s0, 4
      %s21 = int_to_ptr.hbm [resolvable:$true] %s20
      %s22 = sshll.u32 [#allocation2], 4
      %s23 = int_to_ptr.vmem [resolvable:$true] %s22
      %25 = dma.hbm_to_vmem [thread:$0]  %s21, 16, %s23, [#allocation3]
    $region5: #{tpu_custom_call.1} parent=1 // pred_fallthru
      _
    // Predicated region
    $region6: #{tpu_custom_call.1} parent=1 // pred_check
      _
    $region7: #{tpu_custom_call.1} parent=1 // pred_check_branch
      %27 = sbr.rel (0) target = $region9
    $region8: #{tpu_custom_call.1} parent=1 // pred_region
      %29 = vsyncadd [#allocation6], 0
      %s31 = sshll.u32 %s1, 4
      %s32 = int_to_ptr.hbm [resolvable:$true] %s31
      %s33 = sshll.u32 [#allocation5], 4
      %s34 = int_to_ptr.vmem [resolvable:$true] %s33
      %36 = dma.hbm_to_vmem [thread:$0]  %s32, 512, %s34, [#allocation6]
    $region9: #{tpu_custom_call.1} parent=1 // pred_fallthru
      _
    // Predicated region
    $region10: #{tpu_custom_call.1} parent=1 // pred_check
      _
    $region11: #{tpu_custom_call.1} parent=1 // pred_check_branch
      %38 = sbr.rel (0) target = $region13
    $region12: #{tpu_custom_call.1} parent=1 // pred_region
      %40 = vsyncadd [#allocation6], 0
      %s42 = sshll.u32 %s2, 4
      %s43 = int_to_ptr.hbm [resolvable:$true] %s42
      %s44 = sshll.u32 [#allocation7], 4
      %s45 = int_to_ptr.vmem [resolvable:$true] %s44
      %47 = dma.hbm_to_vmem [thread:$0]  %s43, 64, %s45, [#allocation6]
    $region13: #{tpu_custom_call.1} parent=1 // pred_fallthru
      _
    // Predicated region
    $region14: #{tpu_custom_call.1} parent=1 // pred_check
      _
    $region15: #{tpu_custom_call.1} parent=1 // pred_check_branch
      %49 = sbr.rel (0) target = $region17
    $region16: #{tpu_custom_call.1} parent=1 // pred_region
      %51 = vsyncadd [#allocation9], 0
      %s53 = sshll.u32 %s3, 4
      %s54 = int_to_ptr.hbm [resolvable:$true] %s53
      %s55 = sshll.u32 [#allocation8], 4
      %s56 = int_to_ptr.vmem [resolvable:$true] %s55
      %58 = dma.hbm_to_vmem [thread:$0]  %s54, 64, %s56, [#allocation9]
    $region17: #{tpu_custom_call.1} parent=1 // pred_fallthru
      _
    // Predicated region
    $region18: #{tpu_custom_call.1} parent=1 // pred_check
      _
    $region19: #{tpu_custom_call.1} parent=1 // pred_check_branch
      %60 = sbr.rel (0) target = $region21
    $region20: #{tpu_custom_call.1} parent=1 // pred_region
      %62 = vsyncadd [#allocation9], 0
      %s64 = sshll.u32 %s4, 4
      %s65 = int_to_ptr.hbm [resolvable:$true] %s64
      %s66 = sshll.u32 [#allocation10], 4
      %s67 = int_to_ptr.vmem [resolvable:$true] %s66
      %69 = dma.hbm_to_vmem [thread:$0]  %s65, 64, %s67, [#allocation9]
    $region21: #{tpu_custom_call.1} parent=1 // pred_fallthru
      _
    // Predicated region
    $region22: #{tpu_custom_call.1} parent=1 // pred_check
      _
    $region23: #{tpu_custom_call.1} parent=1 // pred_check_branch
      %71 = sbr.rel (0) target = $region25
    $region24: #{tpu_custom_call.1} parent=1 // pred_region
      _
    $region25: #{tpu_custom_call.1} parent=1 // pred_fallthru
      _
    // Predicated region
    $region26: #{tpu_custom_call.1} parent=1 // pred_check
      _
    $region27: #{tpu_custom_call.1} parent=1 // pred_check_branch
      %73 = sbr.rel (0) target = $region29
    $region28: #{tpu_custom_call.1} parent=1 // pred_region
      %75 = dma.done [#allocation3], 16
    $region29: #{tpu_custom_call.1} parent=1 // pred_fallthru
      _
    // Predicated region
    $region30: #{tpu_custom_call.1} parent=1 // pred_check
      _
    $region31: #{tpu_custom_call.1} parent=1 // pred_check_branch
      %77 = sbr.rel (0) target = $region33
    $region32: #{tpu_custom_call.1} parent=1 // pred_region
      %79 = dma.done [#allocation6], 512
    $region33: #{tpu_custom_call.1} parent=1 // pred_fallthru
      _
    // Predicated region
    $region34: #{tpu_custom_call.1} parent=1 // pred_check
      _
    $region35: #{tpu_custom_call.1} parent=1 // pred_check_branch
      %81 = sbr.rel (0) target = $region37
    $region36: #{tpu_custom_call.1} parent=1 // pred_region
      %83 = dma.done [#allocation6], 64
    $region37: #{tpu_custom_call.1} parent=1 // pred_fallthru
      _
    // Predicated region
    $region38: #{tpu_custom_call.1} parent=1 // pred_check
      _
    $region39: #{tpu_custom_call.1} parent=1 // pred_check_branch
      %85 = sbr.rel (0) target = $region41
    $region40: #{tpu_custom_call.1} parent=1 // pred_region
      %87 = dma.done [#allocation9], 64
    $region41: #{tpu_custom_call.1} parent=1 // pred_fallthru
      _
    // Predicated region
    $region42: #{tpu_custom_call.1} parent=1 // pred_check
      _
    $region43: #{tpu_custom_call.1} parent=1 // pred_check_branch
      %89 = sbr.rel (0) target = $region45
    $region44: #{tpu_custom_call.1} parent=1 // pred_region
      %91 = dma.done [#allocation9], 64
    $region45: #{tpu_custom_call.1} parent=1 // pred_fallthru
      _
    %v92 = vld [vmem:[#allocation2] sm:$0x1]
    %v93 = vld [vmem:[#allocation5] sm:$0xf]
    %v95 = vperm.slane %v92, 0
    %v97 = vmul.f32 %v93, %v95
    %vm98 = vcmask 519168
    %v99 = vsel %vm98, %v97, 0.0
    %100 = vadd.xlane.f32.xlu0 %v99
    %v101 = vpop.xlane.xlu0 %100
    %vm102 = vcmp.gt.f32.partialorder %v101, 0.0
    %v103 = vmul.f32 %v101, 0.01
    %v104 = vsel %vm102, %v101, %v103
    %105 = vrot.lane.b32.xlu0 %v95, 64
    %v106 = vpop.permute.xlu0 %105
    %v108 = vmul.f32 %v93, %v106
    %110 = vst [vmem:[#allocation1] ss:$2 sm:$0xff] %v108
    %v111 = vld.sshfl [vmem:[#allocation1] sm:$0xff pattern:$0x75316420]
    %112 = vrot.lane.b32.xlu0 %v111, 64
    %v113 = vpop.permute.xlu0 %112
    %v115 = vsel %vm98, %v113, 0.0
    %116 = vadd.xlane.f32.xlu0 %v115
    %v117 = vpop.xlane.xlu0 %116
    %vm118 = vcmp.gt.f32.partialorder %v117, 0.0
    %v119 = vmul.f32 %v117, 0.01
    %v120 = vsel %vm118, %v117, %v119
    %v121 = vld [vmem:[#allocation5 + $0x4] sm:$0xf]
    %v122 = vmul.f32 %v121, %v95
    %v123 = vsel %vm98, %v122, 0.0
    %124 = vadd.xlane.f32.xlu0 %v123
    %v125 = vpop.xlane.xlu0 %124
    %vm126 = vcmp.gt.f32.partialorder %v125, 0.0
    %v127 = vmul.f32 %v125, 0.01
    %v128 = vsel %vm126, %v125, %v127
    %v129 = vmul.f32 %v121, %v106
    %131 = vst [vmem:[#allocation1] ss:$2 sm:$0xff] %v129
    %v132 = vld.sshfl [vmem:[#allocation1] sm:$0xff pattern:$0x75316420]
    %133 = vrot.lane.b32.xlu0 %v132, 64
    %v134 = vpop.permute.xlu0 %133
    %v136 = vsel %vm98, %v134, 0.0
    %137 = vadd.xlane.f32.xlu0 %v136
    %v138 = vpop.xlane.xlu0 %137
    %vm139 = vcmp.gt.f32.partialorder %v138, 0.0
    %v140 = vmul.f32 %v138, 0.01
    %v141 = vsel %vm139, %v138, %v140
    %v142 = vmax.f32 %v104, %v120
    %v143 = vmax.f32 %v128, %v141
    %v144 = vmax.f32 %v142, %v143
    %v145 = vsub.f32 %v104, %v144
    %v146 = vmul.f32 %v145, 1.442695
    %v147 = vpow.pop %v146
    %v148 = vsub.f32 %v120, %v144
    %v149 = vmul.f32 %v148, 1.442695
    %v150 = vpow.pop %v149
    %v151 = vsub.f32 %v128, %v144
    %v152 = vmul.f32 %v151, 1.442695
    %v153 = vpow.pop %v152
    %v154 = vsub.f32 %v141, %v144
    %v155 = vmul.f32 %v154, 1.442695
    %v156 = vpow.pop %v155
    %v157 = vadd.f32 %v147, %v150
    %v158 = vadd.f32 %v157, %v153
    %v159 = vadd.f32 %v158, %v156
    %v160 = vrcp.pop %v159
    %v161 = vmul.f32 %v159, %v160
    %v162 = vsub.f32 1.0, %v161
    %v163 = vmul.f32 %v160, %v162
    %v164 = vadd.f32 %v160, %v163
    %vm165 = vweird.f32 %v159
    %vm166 = vweird.f32 %v160
    %vm167 = vmor %vm165, %vm166
    %v168 = vsel %vm167, %v160, %v164
    %v169 = vand.u32 2147483647, %v159
    %vm170 = vcmp.eq.f32.partialorder %v169, 8.507059e+37
    %v171 = vand.u32 %v159, 2147483648
    %v172 = vor.u32 1.1754944e-38, %v171
    %v173 = vsel %vm170, %v172, %v168
    %v174 = vmul.f32 1.0, %v173
    %v175 = vmul.f32 %v147, %v174
    %v176 = vld [vmem:[#allocation7] sm:$0xf]
    %v177 = vmul.f32 %v175, %v176
    %v178 = vmul.f32 %v150, %v174
    %v179 = vld [vmem:[#allocation8] sm:$0xf]
    %v180 = vmul.f32 %v178, %v179
    %v181 = vadd.f32 %v177, %v180
    %v182 = vmul.f32 %v153, %v174
    %v183 = vld [vmem:[#allocation10] sm:$0xf]
    %v184 = vmul.f32 %v182, %v183
    %v185 = vadd.f32 %v181, %v184
    %v186 = vmul.f32 %v156, %v174
    %v187 = vld [vmem:[%s5] sm:$0xf]
    %v188 = vmul.f32 %v186, %v187
    %v189 = vadd.f32 %v185, %v188
    %vm190 = vcmask 257024
    %191 = vst.msk [vmem:[#allocation11] sm:$0xf] %vm190, %v189
    %v192 = vld [vmem:[#allocation5 + $0x8] sm:$0xf]
    %v193 = vmul.f32 %v192, %v95
    %v194 = vsel %vm98, %v193, 0.0
    %195 = vadd.xlane.f32.xlu0 %v194
    %v196 = vpop.xlane.xlu0 %195
    %vm197 = vcmp.gt.f32.partialorder %v196, 0.0
    %v198 = vmul.f32 %v196, 0.01
    %v199 = vsel %vm197, %v196, %v198
    %v200 = vmul.f32 %v192, %v106
    %202 = vst [vmem:[#allocation1] ss:$2 sm:$0xff] %v200
    %v203 = vld.sshfl [vmem:[#allocation1] sm:$0xff pattern:$0x75316420]
    %204 = vrot.lane.b32.xlu0 %v203, 64
    %v205 = vpop.permute.xlu0 %204
    %v207 = vsel %vm98, %v205, 0.0
    %208 = vadd.xlane.f32.xlu0 %v207
    %v209 = vpop.xlane.xlu0 %208
    %vm210 = vcmp.gt.f32.partialorder %v209, 0.0
    %v211 = vmul.f32 %v209, 0.01
    %v212 = vsel %vm210, %v209, %v211
    %v213 = vld [vmem:[#allocation5 + $0xc] sm:$0xf]
    %v214 = vmul.f32 %v213, %v95
    %v215 = vsel %vm98, %v214, 0.0
    %216 = vadd.xlane.f32.xlu0 %v215
    %v217 = vpop.xlane.xlu0 %216
    %vm218 = vcmp.gt.f32.partialorder %v217, 0.0
    %v219 = vmul.f32 %v217, 0.01
    %v220 = vsel %vm218, %v217, %v219
    %v221 = vmul.f32 %v213, %v106
    %223 = vst [vmem:[#allocation1] ss:$2 sm:$0xff] %v221
    %v224 = vld.sshfl [vmem:[#allocation1] sm:$0xff pattern:$0x75316420]
    %225 = vrot.lane.b32.xlu0 %v224, 64
    %v226 = vpop.permute.xlu0 %225
    %v228 = vsel %vm98, %v226, 0.0
    %229 = vadd.xlane.f32.xlu0 %v228
    %v230 = vpop.xlane.xlu0 %229
    %vm231 = vcmp.gt.f32.partialorder %v230, 0.0
    %v232 = vmul.f32 %v230, 0.01
    %v233 = vsel %vm231, %v230, %v232
    %v234 = vmax.f32 %v199, %v212
    %v235 = vmax.f32 %v220, %v233
    %v236 = vmax.f32 %v234, %v235
    %v237 = vsub.f32 %v199, %v236
    %v238 = vmul.f32 %v237, 1.442695
    %v239 = vpow.pop %v238
    %v240 = vsub.f32 %v212, %v236
    %v241 = vmul.f32 %v240, 1.442695
    %v242 = vpow.pop %v241
    %v243 = vsub.f32 %v220, %v236
    %v244 = vmul.f32 %v243, 1.442695
    %v245 = vpow.pop %v244
    %v246 = vsub.f32 %v233, %v236
    %v247 = vmul.f32 %v246, 1.442695
    %v248 = vpow.pop %v247
    %v249 = vadd.f32 %v239, %v242
    %v250 = vadd.f32 %v249, %v245
    %v251 = vadd.f32 %v250, %v248
    %v252 = vrcp.pop %v251
    %v253 = vmul.f32 %v251, %v252
    %v254 = vsub.f32 1.0, %v253
    %v255 = vmul.f32 %v252, %v254
    %v256 = vadd.f32 %v252, %v255
    %vm257 = vweird.f32 %v251
    %vm258 = vweird.f32 %v252
    %vm259 = vmor %vm257, %vm258
    %v260 = vsel %vm259, %v252, %v256
    %v261 = vand.u32 2147483647, %v251
    %vm262 = vcmp.eq.f32.partialorder %v261, 8.507059e+37
    %v263 = vand.u32 %v251, 2147483648
    %v264 = vor.u32 1.1754944e-38, %v263
    %v265 = vsel %vm262, %v264, %v260
    %v266 = vmul.f32 1.0, %v265
    %v267 = vmul.f32 %v239, %v266
    %v268 = vld [vmem:[#allocation7] sm:$0xf]
    %v269 = vmul.f32 %v267, %v268
    %v270 = vmul.f32 %v242, %v266
    %v271 = vld [vmem:[#allocation8] sm:$0xf]
    %v272 = vmul.f32 %v270, %v271
    %v273 = vadd.f32 %v269, %v272
    %v274 = vmul.f32 %v245, %v266
    %v275 = vld [vmem:[#allocation10] sm:$0xf]
    %v276 = vmul.f32 %v274, %v275
    %v277 = vadd.f32 %v273, %v276
    %v278 = vmul.f32 %v248, %v266
    %v279 = vld [vmem:[%s5] sm:$0xf]
    %v280 = vmul.f32 %v278, %v279
    %v281 = vadd.f32 %v277, %v280
    %vm282 = vcmask 519424
    %283 = vst.msk [vmem:[#allocation11] sm:$0xf] %vm282, %v281
    %v284 = vld [vmem:[#allocation5 + $0x10] sm:$0xf]
    %v285 = vmul.f32 %v284, %v95
    %v286 = vsel %vm98, %v285, 0.0
    %287 = vadd.xlane.f32.xlu0 %v286
    %v288 = vpop.xlane.xlu0 %287
    %vm289 = vcmp.gt.f32.partialorder %v288, 0.0
    %v290 = vmul.f32 %v288, 0.01
    %v291 = vsel %vm289, %v288, %v290
    %v292 = vmul.f32 %v284, %v106
    %294 = vst [vmem:[#allocation1] ss:$2 sm:$0xff] %v292
    %v295 = vld.sshfl [vmem:[#allocation1] sm:$0xff pattern:$0x75316420]
    %296 = vrot.lane.b32.xlu0 %v295, 64
    %v297 = vpop.permute.xlu0 %296
    %v299 = vsel %vm98, %v297, 0.0
    %300 = vadd.xlane.f32.xlu0 %v299
    %v301 = vpop.xlane.xlu0 %300
    %vm302 = vcmp.gt.f32.partialorder %v301, 0.0
    %v303 = vmul.f32 %v301, 0.01
    %v304 = vsel %vm302, %v301, %v303
    %v305 = vld [vmem:[#allocation5 + $0x14] sm:$0xf]
    %v306 = vmul.f32 %v305, %v95
    %v307 = vsel %vm98, %v306, 0.0
    %308 = vadd.xlane.f32.xlu0 %v307
    %v309 = vpop.xlane.xlu0 %308
    %vm310 = vcmp.gt.f32.partialorder %v309, 0.0
    %v311 = vmul.f32 %v309, 0.01
    %v312 = vsel %vm310, %v309, %v311
    %v313 = vmul.f32 %v305, %v106
    %315 = vst [vmem:[#allocation1] ss:$2 sm:$0xff] %v313
    %v316 = vld.sshfl [vmem:[#allocation1] sm:$0xff pattern:$0x75316420]
    %317 = vrot.lane.b32.xlu0 %v316, 64
    %v318 = vpop.permute.xlu0 %317
    %v320 = vsel %vm98, %v318, 0.0
    %321 = vadd.xlane.f32.xlu0 %v320
    %v322 = vpop.xlane.xlu0 %321
    %vm323 = vcmp.gt.f32.partialorder %v322, 0.0
    %v324 = vmul.f32 %v322, 0.01
    %v325 = vsel %vm323, %v322, %v324
    %v326 = vmax.f32 %v291, %v304
    %v327 = vmax.f32 %v312, %v325
    %v328 = vmax.f32 %v326, %v327
    %v329 = vsub.f32 %v291, %v328
    %v330 = vmul.f32 %v329, 1.442695
    %v331 = vpow.pop %v330
    %v332 = vsub.f32 %v304, %v328
    %v333 = vmul.f32 %v332, 1.442695
    %v334 = vpow.pop %v333
    %v335 = vsub.f32 %v312, %v328
    %v336 = vmul.f32 %v335, 1.442695
    %v337 = vpow.pop %v336
    %v338 = vsub.f32 %v325, %v328
    %v339 = vmul.f32 %v338, 1.442695
    %v340 = vpow.pop %v339
    %v341 = vadd.f32 %v331, %v334
    %v342 = vadd.f32 %v341, %v337
    %v343 = vadd.f32 %v342, %v340
    %v344 = vrcp.pop %v343
    %v345 = vmul.f32 %v343, %v344
    %v346 = vsub.f32 1.0, %v345
    %v347 = vmul.f32 %v344, %v346
    %v348 = vadd.f32 %v344, %v347
    %vm349 = vweird.f32 %v343
    %vm350 = vweird.f32 %v344
    %vm351 = vmor %vm349, %vm350
    %v352 = vsel %vm351, %v344, %v348
    %v353 = vand.u32 2147483647, %v343
    %vm354 = vcmp.eq.f32.partialorder %v353, 8.507059e+37
    %v355 = vand.u32 %v343, 2147483648
    %v356 = vor.u32 1.1754944e-38, %v355
    %v357 = vsel %vm354, %v356, %v352
    %v358 = vmul.f32 1.0, %v357
    %v359 = vmul.f32 %v331, %v358
    %v360 = vld [vmem:[#allocation7] sm:$0xf]
    %v361 = vmul.f32 %v359, %v360
    %v362 = vmul.f32 %v334, %v358
    %v363 = vld [vmem:[#allocation8] sm:$0xf]
    %v364 = vmul.f32 %v362, %v363
    %v365 = vadd.f32 %v361, %v364
    %v366 = vmul.f32 %v337, %v358
    %v367 = vld [vmem:[#allocation10] sm:$0xf]
    %v368 = vmul.f32 %v366, %v367
    %v369 = vadd.f32 %v365, %v368
    %v370 = vmul.f32 %v340, %v358
    %v371 = vld [vmem:[%s5] sm:$0xf]
    %v372 = vmul.f32 %v370, %v371
    %v373 = vadd.f32 %v369, %v372
    %vm374 = vcmask 781824
    %375 = vst.msk [vmem:[#allocation11] sm:$0xf] %vm374, %v373
    %v376 = vld [vmem:[#allocation5 + $0x18] sm:$0xf]
    %v377 = vmul.f32 %v376, %v95
    %v378 = vsel %vm98, %v377, 0.0
    %379 = vadd.xlane.f32.xlu0 %v378
    %v380 = vpop.xlane.xlu0 %379
    %vm381 = vcmp.gt.f32.partialorder %v380, 0.0
    %v382 = vmul.f32 %v380, 0.01
    %v383 = vsel %vm381, %v380, %v382
    %v384 = vmul.f32 %v376, %v106
    %386 = vst [vmem:[#allocation1] ss:$2 sm:$0xff] %v384
    %v387 = vld.sshfl [vmem:[#allocation1] sm:$0xff pattern:$0x75316420]
    %388 = vrot.lane.b32.xlu0 %v387, 64
    %v389 = vpop.permute.xlu0 %388
    %v391 = vsel %vm98, %v389, 0.0
    %392 = vadd.xlane.f32.xlu0 %v391
    %v393 = vpop.xlane.xlu0 %392
    %vm394 = vcmp.gt.f32.partialorder %v393, 0.0
    %v395 = vmul.f32 %v393, 0.01
    %v396 = vsel %vm394, %v393, %v395
    %v397 = vld [vmem:[#allocation5 + $0x1c] sm:$0xf]
    %v398 = vmul.f32 %v397, %v95
    %v399 = vsel %vm98, %v398, 0.0
    %400 = vadd.xlane.f32.xlu0 %v399
    %v401 = vpop.xlane.xlu0 %400
    %vm402 = vcmp.gt.f32.partialorder %v401, 0.0
    %v403 = vmul.f32 %v401, 0.01
    %v404 = vsel %vm402, %v401, %v403
    %v405 = vmul.f32 %v397, %v106
    %407 = vst [vmem:[#allocation1] ss:$2 sm:$0xff] %v405
    %v408 = vld.sshfl [vmem:[#allocation1] sm:$0xff pattern:$0x75316420]
    %409 = vrot.lane.b32.xlu0 %v408, 64
    %v410 = vpop.permute.xlu0 %409
    %v412 = vsel %vm98, %v410, 0.0
    %413 = vadd.xlane.f32.xlu0 %v412
    %v414 = vpop.xlane.xlu0 %413
    %vm415 = vcmp.gt.f32.partialorder %v414, 0.0
    %v416 = vmul.f32 %v414, 0.01
    %v417 = vsel %vm415, %v414, %v416
    %v418 = vmax.f32 %v383, %v396
    %v419 = vmax.f32 %v404, %v417
    %v420 = vmax.f32 %v418, %v419
    %v421 = vsub.f32 %v383, %v420
    %v422 = vmul.f32 %v421, 1.442695
    %v423 = vpow.pop %v422
    %v424 = vsub.f32 %v396, %v420
    %v425 = vmul.f32 %v424, 1.442695
    %v426 = vpow.pop %v425
    %v427 = vsub.f32 %v404, %v420
    %v428 = vmul.f32 %v427, 1.442695
    %v429 = vpow.pop %v428
    %v430 = vsub.f32 %v417, %v420
    %v431 = vmul.f32 %v430, 1.442695
    %v432 = vpow.pop %v431
    %v433 = vadd.f32 %v423, %v426
    %v434 = vadd.f32 %v433, %v429
    %v435 = vadd.f32 %v434, %v432
    %v436 = vrcp.pop %v435
    %v437 = vmul.f32 %v435, %v436
    %v438 = vsub.f32 1.0, %v437
    %v439 = vmul.f32 %v436, %v438
    %v440 = vadd.f32 %v436, %v439
    %vm441 = vweird.f32 %v435
    %vm442 = vweird.f32 %v436
    %vm443 = vmor %vm441, %vm442
    %v444 = vsel %vm443, %v436, %v440
    %v445 = vand.u32 2147483647, %v435
    %vm446 = vcmp.eq.f32.partialorder %v445, 8.507059e+37
    %v447 = vand.u32 %v435, 2147483648
    %v448 = vor.u32 1.1754944e-38, %v447
    %v449 = vsel %vm446, %v448, %v444
    %v450 = vmul.f32 1.0, %v449
    %v451 = vmul.f32 %v423, %v450
    %v452 = vld [vmem:[#allocation7] sm:$0xf]
    %v453 = vmul.f32 %v451, %v452
    %v454 = vmul.f32 %v426, %v450
    %v455 = vld [vmem:[#allocation8] sm:$0xf]
    %v456 = vmul.f32 %v454, %v455
    %v457 = vadd.f32 %v453, %v456
    %v458 = vmul.f32 %v429, %v450
    %v459 = vld [vmem:[#allocation10] sm:$0xf]
    %v460 = vmul.f32 %v458, %v459
    %v461 = vadd.f32 %v457, %v460
    %v462 = vmul.f32 %v432, %v450
    %v463 = vld [vmem:[%s5] sm:$0xf]
    %v464 = vmul.f32 %v462, %v463
    %v465 = vadd.f32 %v461, %v464
    %vm466 = vcmask 1044224
    %467 = vst.msk [vmem:[#allocation11] sm:$0xf] %vm466, %v465
    // Predicated region
    $region46: #{tpu_custom_call.1} parent=1 // pred_check
      _
    $region47: #{tpu_custom_call.1} parent=1 // pred_check_branch
      %469 = sbr.rel (0) target = $region49
    $region48: #{tpu_custom_call.1} parent=1 // pred_region
      %471 = vsyncadd [#allocation4], 0
      %s473 = sshll.u32 [#allocation11], 4
      %s474 = int_to_ptr.vmem [resolvable:$true] %s473
      %s475 = sshll.u32 %s6, 4
      %s476 = int_to_ptr.hbm [resolvable:$true] %s475
      %478 = dma.vmem_to_hbm [thread:$0]  %s474, 64, %s476, [#allocation4]
    $region49: #{tpu_custom_call.1} parent=1 // pred_fallthru
      _
    // Predicated region
    $region50: #{tpu_custom_call.1} parent=1 // pred_check
      _
    $region51: #{tpu_custom_call.1} parent=1 // pred_check_branch
      %480 = sbr.rel (0) target = $region53
    $region52: #{tpu_custom_call.1} parent=1 // pred_region
      %482 = dma.done [#allocation4], 64
    $region53: #{tpu_custom_call.1} parent=1 // pred_fallthru
      _
    %483 = vsyncpa [#allocation3], 1
    %484 = vsyncpa [#allocation6], 1
    %485 = vsyncpa [#allocation9], 1
    %486 = vsyncpa [#allocation4], 1

</llo_original>
